<compile_context>
chip_gen: v6e
topology: v6e:2x2x1
jax: 0.10.0
libtpu: 0.0.40
codegen_flags: <defaults>
</compile_context>

<pallas_src>
import jax
import jax.numpy as jnp
from jax.experimental import pallas as pl
from jax.experimental.pallas import tpu as pltpu

LANE = 128   # lane tile (last dim)
SUB = 8      # sublane multiple for the streamed batch tile


def _round_up(x, m):
    return ((x + m - 1) // m) * m


def _lane_pad(n):
    return _round_up(max(int(n), 1), LANE)


# ---------------------------------------------------------------------------
# Kernels
# ---------------------------------------------------------------------------
def _valnet_kernel_v(obs_ref, w1_ref, b1_ref, w2_ref, b2_ref, wv_ref, bv_ref,
                     out_ref):
    # obs arrives in f32 at its real feature width; cast to bf16 in-kernel
    # (cheap VPU op, hidden under the MXU passes). Accumulate / epilogue in f32.
    x = obs_ref[...].astype(jnp.bfloat16)                                  # [TB, D]
    h1 = jnp.dot(x, w1_ref[...], preferred_element_type=jnp.float32)
    h1 = jnp.maximum(h1 + b1_ref[...], 0.0)                                # [TB, Hp]
    h2 = jnp.dot(h1.astype(jnp.bfloat16), w2_ref[...],
                 preferred_element_type=jnp.float32)
    h2 = jnp.maximum(h2 + b2_ref[...], 0.0)                                # [TB, Hp]
    # Value head: VPU mul + lane (XLU) reduce -> narrow [TB, 1] store.
    v = jnp.sum(h2 * wv_ref[...], axis=-1, keepdims=True) + bv_ref[...]
    out_ref[...] = v


def _valnet_kernel_q(obs_ref, act_ref, w1o_ref, w1a_ref, b1_ref, w2_ref,
                     b2_ref, wv_ref, bv_ref, out_ref):
    x = obs_ref[...].astype(jnp.bfloat16)                                  # [TB, D]
    a = act_ref[...].astype(jnp.bfloat16)                                  # [TB, A]
    # torch.cat([obs, actions], 1) @ w1  ==  obs @ w1[:D] + actions @ w1[D:]
    h1 = jnp.dot(x, w1o_ref[...], preferred_element_type=jnp.float32)
    h1 = h1 + jnp.dot(a, w1a_ref[...], preferred_element_type=jnp.float32)
    h1 = jnp.maximum(h1 + b1_ref[...], 0.0)
    h2 = jnp.dot(h1.astype(jnp.bfloat16), w2_ref[...],
                 preferred_element_type=jnp.float32)
    h2 = jnp.maximum(h2 + b2_ref[...], 0.0)
    v = jnp.sum(h2 * wv_ref[...], axis=-1, keepdims=True) + bv_ref[...]
    out_ref[...] = v


# ---------------------------------------------------------------------------
# Wrapper
# ---------------------------------------------------------------------------
def prepare_params(params, obs_dim):
    """One-time parameter padding/casting (hoisted out of the per-call path).

    params: w1 [D_in, H], b1 [1, H], w2 [H, H], b2 [1, H], wv [H, 1], bv [1, 1]
    where D_in = obs_dim (+ flattened act_dim for Q-networks).
    """
    w1 = jnp.asarray(params["w1"], jnp.float32)
    d_in, hidden = w1.shape
    act_dim = d_in - obs_dim
    assert act_dim >= 0
    # Hidden dim padded to full lane tiles; zero padding keeps the math exact.
    # (v6e/v7x MXUs are 256-wide; we keep 128 since the kernel is mem/overhead
    #  bound and the example hidden dim is small.)
    hp = _round_up(hidden, LANE)

    def pad_cols(x, dt):
        x = jnp.asarray(x, jnp.float32)
        return jnp.pad(x, ((0, 0), (0, hp - x.shape[1]))).astype(dt)

    w2 = jnp.asarray(params["w2"], jnp.float32)
    w2 = jnp.pad(w2, ((0, hp - hidden), (0, hp - hidden))).astype(jnp.bfloat16)

    return {
        "obs_dim": int(obs_dim),
        "act_dim": int(act_dim),
        "hp": int(hp),
        "w1_obs": pad_cols(w1[:obs_dim], jnp.bfloat16),                     # [D, Hp]
        "w1_act": (pad_cols(w1[obs_dim:], jnp.bfloat16)
                   if act_dim > 0 else None),                               # [A, Hp]
        "b1": pad_cols(jnp.asarray(params["b1"]).reshape(1, -1), jnp.float32),
        "w2": w2,                                                           # [Hp, Hp]
        "b2": pad_cols(jnp.asarray(params["b2"]).reshape(1, -1), jnp.float32),
        "wv_row": pad_cols(jnp.asarray(params["wv"], jnp.float32)
                           .reshape(-1, 1).T, jnp.float32),                 # [1, Hp]
        "bv": jnp.asarray(params["bv"], jnp.float32).reshape(1, 1),         # [1, 1]
    }


def valnet_forward(obs, prepared, actions=None, *, batch_tile=4096):
    """Fused ValNet forward. Returns values of shape [B, 1] (float32)."""
    obs = jnp.asarray(obs, jnp.float32)        # stays f32 in HBM; bf16 cast in-kernel
    B, D = obs.shape
    assert D == prepared["obs_dim"], "obs feature dim mismatch with prepared params"
    A = prepared["act_dim"]
    Hp = prepared["hp"]
    has_act = actions is not None
    if has_act:
        assert A > 0, "params were prepared without an action input"
        actions = jnp.asarray(actions, jnp.float32).reshape(B, -1)   # .flatten(1)
        assert actions.shape[1] == A
    else:
        assert A == 0, "params expect actions but none were given"

    # --- Batch tile: as large as a VMEM budget allows (amortizes the ~0.35us
    # per-grid-step overhead), bounded by the requested batch_tile and by B.
    per_row_bytes = 4 * (2 * _lane_pad(D)                        # obs stream  x2 bufs
                         + (2 * _lane_pad(A) if has_act else 0)  # act stream  x2 bufs
                         + 2 * LANE                              # out stream  x2 bufs
                         + 4 * Hp)                               # f32 intermediates
    budget = 24 << 20
    tb_cap = max(SUB, (budget // per_row_bytes) // SUB * SUB)
    tb_cand = max(SUB, min(_round_up(batch_tile, SUB), tb_cap))
    if B <= tb_cand:
        TB = B            # single tile == full batch (block dim == array dim is legal)
    else:
        TB = tb_cand      # multiple of 8; Pallas masks the partial edge tile
    grid = (pl.cdiv(B, TB),)

    # Resident (single-buffered) weights + streamed tiles, with headroom.
    w_bytes = (2 * (prepared["w1_obs"].size
                    + (prepared["w1_act"].size if has_act else 0)
                    + prepared["w2"].size)
               + 4 * (prepared["b1"].size + prepared["b2"].size
                      + prepared["wv_row"].size + 1))
    vmem_limit = int(min(max(2 * (w_bytes + per_row_bytes * TB) + (8 << 20),
                             32 << 20), 96 << 20))

    resident = dict(pipeline_mode=pl.Buffered(1))   # weights never change per step

    if has_act:
        kernel = _valnet_kernel_q
        in_specs = [
            pl.BlockSpec((TB, D), lambda i: (i, 0)),          # obs (streamed, f32)
            pl.BlockSpec((TB, A), lambda i: (i, 0)),          # actions (streamed, f32)
            pl.BlockSpec((D, Hp), lambda i: (0, 0), **resident),
            pl.BlockSpec((A, Hp), lambda i: (0, 0), **resident),
            pl.BlockSpec((1, Hp), lambda i: (0, 0), **resident),
            pl.BlockSpec((Hp, Hp), lambda i: (0, 0), **resident),
            pl.BlockSpec((1, Hp), lambda i: (0, 0), **resident),
            pl.BlockSpec((1, Hp), lambda i: (0, 0), **resident),
            pl.BlockSpec((1, 1), lambda i: (0, 0), **resident),
        ]
        operands = (obs, actions, prepared["w1_obs"], prepared["w1_act"],
                    prepared["b1"], prepared["w2"], prepared["b2"],
                    prepared["wv_row"], prepared["bv"])
    else:
        kernel = _valnet_kernel_v
        in_specs = [
            pl.BlockSpec((TB, D), lambda i: (i, 0)),          # obs (streamed, f32)
            pl.BlockSpec((D, Hp), lambda i: (0, 0), **resident),
            pl.BlockSpec((1, Hp), lambda i: (0, 0), **resident),
            pl.BlockSpec((Hp, Hp), lambda i: (0, 0), **resident),
            pl.BlockSpec((1, Hp), lambda i: (0, 0), **resident),
            pl.BlockSpec((1, Hp), lambda i: (0, 0), **resident),
            pl.BlockSpec((1, 1), lambda i: (0, 0), **resident),
        ]
        operands = (obs, prepared["w1_obs"], prepared["b1"], prepared["w2"],
                    prepared["b2"], prepared["wv_row"], prepared["bv"])

    out = pl.pallas_call(
        kernel,
        out_shape=jax.ShapeDtypeStruct((B, 1), jnp.float32),   # narrow, no batch pad
        grid=grid,
        in_specs=in_specs,
        out_specs=pl.BlockSpec((TB, 1), lambda i: (i, 0)),     # edge-tile writes masked
        compiler_params=pltpu.CompilerParams(
            dimension_semantics=("parallel",),                 # megacore-shard batch axis
            vmem_limit_bytes=vmem_limit),
    )(*operands)

    return out   # already [B, 1]


# ---------------------------------------------------------------------------
# Reference / demo
# ---------------------------------------------------------------------------
def init_params(key, in_dim, hidden_dim):
    """Deterministic synthetic parameter init (shapes match the torch module)."""
    ks = jax.random.split(key, 6)
    s = 0.1
    return {
        "w1": s * jax.random.normal(ks[0], (in_dim, hidden_dim), jnp.float32),
        "b1": s * jax.random.normal(ks[1], (1, hidden_dim), jnp.float32),
        "w2": s * jax.random.normal(ks[2], (hidden_dim, hidden_dim), jnp.float32),
        "b2": s * jax.random.normal(ks[3], (1, hidden_dim), jnp.float32),
        "wv": s * jax.random.normal(ks[4], (hidden_dim, 1), jnp.float32),
        "bv": s * jax.random.normal(ks[5], (1, 1), jnp.float32),
    }


def reference_forward(obs, params, actions=None):
    """Pure-JAX f32 reference of the same forward (correctness check)."""
    x = jnp.asarray(obs, jnp.float32)
    if actions is not None:
        a = jnp.asarray(actions, jnp.float32).reshape(actions.shape[0], -1)
        x = jnp.concatenate([x, a], axis=1)
    h1 = jnp.maximum(x @ params["w1"] + params["b1"], 0.0)
    h2 = jnp.maximum(h1 @ params["w2"] + params["b2"], 0.0)
    return h2 @ params["wv"] + params["bv"]


if __name__ == "__main__":
    key = jax.random.PRNGKey(0)
    k_obs, k_act, k_p1, k_p2 = jax.random.split(key, 4)

    B, OBS_DIM, HIDDEN, ACT_DIM = 2, 16, 32, 8
    obs = jax.random.normal(k_obs, (B, OBS_DIM), jnp.float32)
    actions = jax.random.normal(k_act, (B, ACT_DIM), jnp.float32)

    # bf16 matmul operands -> compare to f32 reference with loosened tolerance.
    TOL = dict(atol=2e-2, rtol=2e-2)

    # (1) V(s): backbone input dim = obs_dim.
    params_v = init_params(k_p1, OBS_DIM, HIDDEN)
    prep_v = prepare_params(params_v, OBS_DIM)
    values = jax.block_until_ready(valnet_forward(obs, prep_v))
    values_ref = reference_forward(obs, params_v)
    assert values.shape == (B, 1)
    assert jnp.allclose(values, values_ref, **TOL)

    # (2) Q(s, a): backbone input dim = obs_dim + act_dim (actions concatenated).
    params_q = init_params(k_p2, OBS_DIM + ACT_DIM, HIDDEN)
    prep_q = prepare_params(params_q, OBS_DIM)
    q_values = jax.block_until_ready(valnet_forward(obs, prep_q, actions=actions))
    q_ref = reference_forward(obs, params_q, actions=actions)
    assert q_values.shape == (B, 1)
    assert jnp.allclose(q_values, q_ref, **TOL)

    # TODO(synk): torch.as_tensor device placement has no Pallas analogue; JAX's
    # default TPU placement is assumed.
    print("KERNEL_OK")
</pallas_src>

<mosaic_0001>
module attributes {stable_mosaic.version = 11 : i64} {
  func.func @_valnet_kernel_v(%arg0: i32, %arg1: memref<2x16xf32, #tpu.memory_space<vmem>>, %arg2: memref<16x128xbf16, #tpu.memory_space<vmem>>, %arg3: memref<1x128xf32, #tpu.memory_space<vmem>>, %arg4: memref<128x128xbf16, #tpu.memory_space<vmem>>, %arg5: memref<1x128xf32, #tpu.memory_space<vmem>>, %arg6: memref<1x128xf32, #tpu.memory_space<vmem>>, %arg7: memref<1x1xf32, #tpu.memory_space<vmem>>, %arg8: memref<2x1xf32, #tpu.memory_space<vmem>>) attributes {dimension_semantics = [#tpu.dimension_semantics<parallel>], iteration_bounds = array<i64: 1>, scalar_prefetch = 0 : i64, scratch_operands = 0 : i64, tpu.core_type = #tpu.core_type<tc>, window_params = [{transform_indices = @transform_0, window_bounds = array<i64: 2, 16>}, {pipeline_mode = #tpu.pipeline_mode<synchronous>, transform_indices = @transform_1, window_bounds = array<i64: 16, 128>}, {pipeline_mode = #tpu.pipeline_mode<synchronous>, transform_indices = @transform_2, window_bounds = array<i64: 1, 128>}, {pipeline_mode = #tpu.pipeline_mode<synchronous>, transform_indices = @transform_3, window_bounds = array<i64: 128, 128>}, {pipeline_mode = #tpu.pipeline_mode<synchronous>, transform_indices = @transform_4, window_bounds = array<i64: 1, 128>}, {pipeline_mode = #tpu.pipeline_mode<synchronous>, transform_indices = @transform_5, window_bounds = array<i64: 1, 128>}, {pipeline_mode = #tpu.pipeline_mode<synchronous>, transform_indices = @transform_6, window_bounds = array<i64: 1, 1>}, {transform_indices = @transform_7, window_bounds = array<i64: 2, 1>}]} {
    %c0 = arith.constant 0 : index
    %c0_0 = arith.constant 0 : index
    %0 = vector.load %arg1[%c0, %c0_0] : memref<2x16xf32, #tpu.memory_space<vmem>>, vector<2x16xf32>
    %1 = arith.truncf %0 : vector<2x16xf32> to vector<2x16xbf16>
    %c0_1 = arith.constant 0 : index
    %c0_2 = arith.constant 0 : index
    %2 = vector.load %arg2[%c0_1, %c0_2] : memref<16x128xbf16, #tpu.memory_space<vmem>>, vector<16x128xbf16>
    %cst = arith.constant dense<0.000000e+00> : vector<2x128xf32>
    %3 = tpu.matmul %1, %2, %cst {dimension_numbers = #tpu.dot_dimension_numbers<[1], [0], [0], [1], [0, 0, 1, 1], [], []>} : vector<2x16xbf16>, vector<16x128xbf16>, vector<2x128xf32> -> vector<2x128xf32>
    %c0_3 = arith.constant 0 : index
    %c0_4 = arith.constant 0 : index
    %4 = vector.load %arg3[%c0_3, %c0_4] : memref<1x128xf32, #tpu.memory_space<vmem>>, vector<1x128xf32>
    %5 = vector.broadcast %4 : vector<1x128xf32> to vector<2x128xf32>
    %6 = arith.addf %3, %5 : vector<2x128xf32>
    %cst_5 = arith.constant 0.000000e+00 : f32
    %7 = vector.broadcast %cst_5 : f32 to vector<2x128xf32>
    %8 = arith.maximumf %6, %7 : vector<2x128xf32>
    %9 = arith.truncf %8 : vector<2x128xf32> to vector<2x128xbf16>
    %c0_6 = arith.constant 0 : index
    %c0_7 = arith.constant 0 : index
    %10 = vector.load %arg4[%c0_6, %c0_7] : memref<128x128xbf16, #tpu.memory_space<vmem>>, vector<128x128xbf16>
    %cst_8 = arith.constant dense<0.000000e+00> : vector<2x128xf32>
    %11 = tpu.matmul %9, %10, %cst_8 {dimension_numbers = #tpu.dot_dimension_numbers<[1], [0], [0], [1], [0, 0, 1, 1], [], []>} : vector<2x128xbf16>, vector<128x128xbf16>, vector<2x128xf32> -> vector<2x128xf32>
    %c0_9 = arith.constant 0 : index
    %c0_10 = arith.constant 0 : index
    %12 = vector.load %arg5[%c0_9, %c0_10] : memref<1x128xf32, #tpu.memory_space<vmem>>, vector<1x128xf32>
    %13 = vector.broadcast %12 : vector<1x128xf32> to vector<2x128xf32>
    %14 = arith.addf %11, %13 : vector<2x128xf32>
    %cst_11 = arith.constant 0.000000e+00 : f32
    %15 = vector.broadcast %cst_11 : f32 to vector<2x128xf32>
    %16 = arith.maximumf %14, %15 : vector<2x128xf32>
    %c0_12 = arith.constant 0 : index
    %c0_13 = arith.constant 0 : index
    %17 = vector.load %arg6[%c0_12, %c0_13] : memref<1x128xf32, #tpu.memory_space<vmem>>, vector<1x128xf32>
    %18 = vector.broadcast %17 : vector<1x128xf32> to vector<2x128xf32>
    %19 = arith.mulf %16, %18 : vector<2x128xf32>
    %cst_14 = arith.constant dense<0.000000e+00> : vector<2xf32>
    %20 = vector.multi_reduction <add>, %19, %cst_14 [1] : vector<2x128xf32> to vector<2xf32>
    %21 = vector.shape_cast %20 : vector<2xf32> to vector<2x1xf32>
    %c0_15 = arith.constant 0 : index
    %c0_16 = arith.constant 0 : index
    %22 = vector.load %arg7[%c0_15, %c0_16] : memref<1x1xf32, #tpu.memory_space<vmem>>, vector<1x1xf32>
    %23 = vector.broadcast %22 : vector<1x1xf32> to vector<2x1xf32>
    %24 = arith.addf %21, %23 : vector<2x1xf32>
    %c0_17 = arith.constant 0 : index
    %c0_18 = arith.constant 0 : index
    %25 = vector.load %arg8[%c0_17, %c0_18] : memref<2x1xf32, #tpu.memory_space<vmem>>, vector<2x1xf32>
    tpu.vector_store %arg8[%c0_17, %c0_18], %24 {strides = array<i32>} : memref<2x1xf32, #tpu.memory_space<vmem>>, vector<2x1xf32>,
    return
  }
  func.func @transform_0(%arg0: i32) -> (i32, i32) {
    %c0_i32 = arith.constant 0 : i32
    %c0_i32_0 = arith.constant 0 : i32
    return %arg0, %c0_i32 : i32, i32
  }
  func.func @transform_1(%arg0: i32) -> (i32, i32) {
    %c0_i32 = arith.constant 0 : i32
    %c0_i32_0 = arith.constant 0 : i32
    %c0_i32_1 = arith.constant 0 : i32
    return %c0_i32, %c0_i32_0 : i32, i32
  }
  func.func @transform_2(%arg0: i32) -> (i32, i32) {
    %c0_i32 = arith.constant 0 : i32
    %c0_i32_0 = arith.constant 0 : i32
    %c0_i32_1 = arith.constant 0 : i32
    return %c0_i32, %c0_i32_0 : i32, i32
  }
  func.func @transform_3(%arg0: i32) -> (i32, i32) {
    %c0_i32 = arith.constant 0 : i32
    %c0_i32_0 = arith.constant 0 : i32
    %c0_i32_1 = arith.constant 0 : i32
    return %c0_i32, %c0_i32_0 : i32, i32
  }
  func.func @transform_4(%arg0: i32) -> (i32, i32) {
    %c0_i32 = arith.constant 0 : i32
    %c0_i32_0 = arith.constant 0 : i32
    %c0_i32_1 = arith.constant 0 : i32
    return %c0_i32, %c0_i32_0 : i32, i32
  }
  func.func @transform_5(%arg0: i32) -> (i32, i32) {
    %c0_i32 = arith.constant 0 : i32
    %c0_i32_0 = arith.constant 0 : i32
    %c0_i32_1 = arith.constant 0 : i32
    return %c0_i32, %c0_i32_0 : i32, i32
  }
  func.func @transform_6(%arg0: i32) -> (i32, i32) {
    %c0_i32 = arith.constant 0 : i32
    %c0_i32_0 = arith.constant 0 : i32
    %c0_i32_1 = arith.constant 0 : i32
    return %c0_i32, %c0_i32_0 : i32, i32
  }
  func.func @transform_7(%arg0: i32) -> (i32, i32) {
    %c0_i32 = arith.constant 0 : i32
    %c0_i32_0 = arith.constant 0 : i32
    return %arg0, %c0_i32 : i32, i32
  }
}

</mosaic_0001>

<llo_original>
// kernel: tpu_custom_call.1
$region0: #{tpu_custom_call.1}
  #allocation0 [shape = 'u32[]', space=smem, size = 0x4, offset = 0x4, fixed_abs, tag = 'smem constant byte address 0x4 - core index']
  #allocation1 [shape = 'u32[144,128]{1,0:T(1,128)}', space=vmem, size = 0x12000, scoped, tag = 'internal scratch']
  #allocation2 [shape = 'f32[1,1]{1,0:T(1,128)S(1)}', space=vmem, size = 0x200, scoped, tag = 'scoped memory for tpu_custom_call.1']
  %s0 = inlined_call_operand.vmem [shape: f32[2,16], index: 0, kind: input, shape index: {}]
  %s1 = inlined_call_operand.hbm [shape: bf16[16,128], index: 1, kind: input, shape index: {}]
  %s2 = inlined_call_operand.vmem [shape: f32[1,128], index: 2, kind: input, shape index: {}]
  %s3 = inlined_call_operand.hbm [shape: bf16[128,128], index: 3, kind: input, shape index: {}]
  %s4 = inlined_call_operand.vmem [shape: f32[1,128], index: 4, kind: input, shape index: {}]
  %s5 = inlined_call_operand.vmem [shape: f32[1,128], index: 5, kind: input, shape index: {}]
  %s6 = inlined_call_operand.<no memory space> [shape: f32[1,1], index: 6, kind: input, shape index: {}]
  %s7 = inlined_call_operand.vmem [shape: f32[2,1], index: 7, kind: output, shape index: {}]
  %s8 = sld [smem:[#allocation0]]
  $region46: #{tpu_custom_call.1} parent=0
    _
  %s10 = ssub.s32 1, %s8
  %s11 = scalar_select 0, %s10, %s8
  %v12 = vstv %s6
  %13 = vst [vmem:[#allocation2] sm:$0x1] %v12
  $region1: #{tpu_custom_call.1} parent=0
    #allocation3 [shape = 'u8[4096]{0}', space=vmem, size = 0x1000, scoped, tag = 'input window, operand 1, single buffered']
    #allocation4 [shape = 's32[1]{0}', space=sflag, size = 0x4, scoped, tag = 'scoped memory for tpu_custom_call.1']
    #allocation5 [shape = 'u8[32768]{0}', space=vmem, size = 0x8000, scoped, tag = 'input window, operand 3, single buffered']
    #allocation6 [shape = 's32[1]{0}', space=sflag, size = 0x4, scoped, tag = 'scoped memory for tpu_custom_call.1']
    %14 = vsyncpa [#allocation4], 0
    %15 = vsyncpa [#allocation6], 0
    // Predicated region
    $region2: #{tpu_custom_call.1} parent=1 // pred_check
      _
    $region3: #{tpu_custom_call.1} parent=1 // pred_check_branch
      %17 = sbr.rel (0) target = $region5
    $region4: #{tpu_custom_call.1} parent=1 // pred_region
      _
    $region5: #{tpu_custom_call.1} parent=1 // pred_fallthru
      _
    // Predicated region
    $region6: #{tpu_custom_call.1} parent=1 // pred_check
      _
    $region7: #{tpu_custom_call.1} parent=1 // pred_check_branch
      %19 = sbr.rel (0) target = $region9
    $region8: #{tpu_custom_call.1} parent=1 // pred_region
      %s21 = ssub.s32 128, 128
      %22 = vsyncadd [#allocation4], %s21
      %s23 = sshll.u32 [#allocation3], 4
      %s24 = int_to_ptr.vmem [resolvable:$true] %s23
      %29 = dma.hbm_to_vmem [thread:$0]  %s1, 128, %s24, [#allocation4], 64, 64, 4
    $region9: #{tpu_custom_call.1} parent=1 // pred_fallthru
      _
    // Predicated region
    $region10: #{tpu_custom_call.1} parent=1 // pred_check
      _
    $region11: #{tpu_custom_call.1} parent=1 // pred_check_branch
      %31 = sbr.rel (0) target = $region13
    $region12: #{tpu_custom_call.1} parent=1 // pred_region
      _
    $region13: #{tpu_custom_call.1} parent=1 // pred_fallthru
      _
    // Predicated region
    $region14: #{tpu_custom_call.1} parent=1 // pred_check
      _
    $region15: #{tpu_custom_call.1} parent=1 // pred_check_branch
      %33 = sbr.rel (0) target = $region17
    $region16: #{tpu_custom_call.1} parent=1 // pred_region
      %s35 = ssub.s32 1024, 1024
      %36 = vsyncadd [#allocation6], %s35
      %s37 = sshll.u32 [#allocation5], 4
      %s38 = int_to_ptr.vmem [resolvable:$true] %s37
      %43 = dma.hbm_to_vmem [thread:$0]  %s3, 1024, %s38, [#allocation6], 64, 64, 4
    $region17: #{tpu_custom_call.1} parent=1 // pred_fallthru
      _
    // Predicated region
    $region18: #{tpu_custom_call.1} parent=1 // pred_check
      _
    $region19: #{tpu_custom_call.1} parent=1 // pred_check_branch
      %45 = sbr.rel (0) target = $region21
    $region20: #{tpu_custom_call.1} parent=1 // pred_region
      _
    $region21: #{tpu_custom_call.1} parent=1 // pred_fallthru
      _
    // Predicated region
    $region22: #{tpu_custom_call.1} parent=1 // pred_check
      _
    $region23: #{tpu_custom_call.1} parent=1 // pred_check_branch
      %47 = sbr.rel (0) target = $region25
    $region24: #{tpu_custom_call.1} parent=1 // pred_region
      _
    $region25: #{tpu_custom_call.1} parent=1 // pred_fallthru
      _
    // Predicated region
    $region26: #{tpu_custom_call.1} parent=1 // pred_check
      _
    $region27: #{tpu_custom_call.1} parent=1 // pred_check_branch
      %49 = sbr.rel (0) target = $region29
    $region28: #{tpu_custom_call.1} parent=1 // pred_region
      _
    $region29: #{tpu_custom_call.1} parent=1 // pred_fallthru
      _
    // Predicated region
    $region30: #{tpu_custom_call.1} parent=1 // pred_check
      _
    $region31: #{tpu_custom_call.1} parent=1 // pred_check_branch
      %51 = sbr.rel (0) target = $region33
    $region32: #{tpu_custom_call.1} parent=1 // pred_region
      %52 = dma.done [#allocation4], 128
    $region33: #{tpu_custom_call.1} parent=1 // pred_fallthru
      _
    // Predicated region
    $region34: #{tpu_custom_call.1} parent=1 // pred_check
      _
    $region35: #{tpu_custom_call.1} parent=1 // pred_check_branch
      %54 = sbr.rel (0) target = $region37
    $region36: #{tpu_custom_call.1} parent=1 // pred_region
      %55 = dma.done [#allocation6], 1024
    $region37: #{tpu_custom_call.1} parent=1 // pred_fallthru
      _
    %v57 = vld [vmem:[%s0] sm:$0x3]
    %v58 = vpack.c.bf16 %v57, %v57
    %v59 = vld [vmem:[#allocation3] sm:$0xf]
    %v60 = vld [vmem:[#allocation3 + $0x4] sm:$0xf]
    %v61 = vld [vmem:[%s2] sm:$0x1]
    %v63 = vlaneseq
    %v64 = vshrl.u32 %v63, 7
    %v65 = vsub.s32 0, %v64
    %v66 = vrot.slane %v61, %v65
    %v70 = vunpack.c.l.b16 %v59
    %v71 = vunpack.c.l.b16 %v60
    %v72 = vpack.c.b16 %v71, %v70
    %vm74 = vcmask 130048
    %v76 = vsel %vm74, %v58, 0
    %78 = vmatprep.subr.bf16.mxu0 0
    %79 = vmatpush1.bf16.msra.mxu0 0
    %80 = vmatprep.subr.bf16.mxu0 0
    %81 = vmatpush1.bf16.msra.mxu0 0
    %82 = vmatprep.subr.bf16.mxu0 0
    %83 = vmatpush1.bf16.msra.mxu0 0
    %84 = vmatprep.subr.bf16.mxu0 0
    %85 = vmatpush1.bf16.msra.mxu0 0
    %86 = vmatprep.subr.bf16.mxu0 0
    %87 = vmatpush1.bf16.msra.mxu0 0
    %88 = vmatprep.subr.bf16.mxu0 0
    %89 = vmatpush1.bf16.msra.mxu0 0
    %90 = vmatprep.subr.bf16.mxu0 0
    %91 = vmatpush1.bf16.msra.mxu0 0
    %92 = vmatprep.subr.bf16.mxu0 0
    %93 = vmatpush1.bf16.msra.mxu0 %v72
    %94 = vmatprep.subr.bf16.mxu0 0
    %95 = vmatpush2.bf16.msra.mxu0 0
    %96 = vmatprep.subr.bf16.mxu0 0
    %97 = vmatpush2.bf16.msra.mxu0 0
    %98 = vmatprep.subr.bf16.mxu0 0
    %99 = vmatpush2.bf16.msra.mxu0 0
    %100 = vmatprep.subr.bf16.mxu0 0
    %101 = vmatpush2.bf16.msra.mxu0 0
    %102 = vmatprep.subr.bf16.mxu0 0
    %103 = vmatpush2.bf16.msra.mxu0 0
    %104 = vmatprep.subr.bf16.mxu0 0
    %105 = vmatpush2.bf16.msra.mxu0 0
    %106 = vmatprep.subr.bf16.mxu0 0
    %107 = vmatpush2.bf16.msra.mxu0 0
    %108 = vmatprep.subr.bf16.mxu0 0
    %109 = vmatpush2.bf16.msra.mxu0 0
    %110 = vmatprep.mubr.bf16.mxu0 0
    %111 = vmatmul.mubr.bf16.gmra.mxu0 %v76
    %v112 = vpop.f32.mrf.mxu0
    %v113 = vadd.f32 %v66, %v112
    %v114 = vpop.f32.mrf.mxu0
    %v115 = vpop.f32.mrf.mxu0
    %v116 = vpop.f32.mrf.mxu0
    %117 = vdwg.mxu0
    %v118 = vmax.f32 %v113, 0.0
    %v119 = vpack.c.bf16 %v118, %v118
    %v120 = vld [vmem:[#allocation5] sm:$0xf]
    %v121 = vld [vmem:[#allocation5 + $0x4] sm:$0xf]
    %v122 = vld [vmem:[#allocation5 + $0x8] sm:$0xf]
    %v123 = vld [vmem:[#allocation5 + $0xc] sm:$0xf]
    %v124 = vld [vmem:[#allocation5 + $0x10] sm:$0xf]
    %v125 = vld [vmem:[#allocation5 + $0x14] sm:$0xf]
    %v126 = vld [vmem:[#allocation5 + $0x18] sm:$0xf]
    %v127 = vld [vmem:[#allocation5 + $0x1c] sm:$0xf]
    %v128 = vld [vmem:[#allocation5 + $0x20] sm:$0xf]
    %v129 = vld [vmem:[#allocation5 + $0x24] sm:$0xf]
    %v130 = vld [vmem:[#allocation5 + $0x28] sm:$0xf]
    %v131 = vld [vmem:[#allocation5 + $0x2c] sm:$0xf]
    %v132 = vld [vmem:[#allocation5 + $0x30] sm:$0xf]
    %v133 = vld [vmem:[#allocation5 + $0x34] sm:$0xf]
    %v134 = vld [vmem:[#allocation5 + $0x38] sm:$0xf]
    %v135 = vld [vmem:[#allocation5 + $0x3c] sm:$0xf]
    %v136 = vld [vmem:[%s4] sm:$0x1]
    %v138 = vlaneseq
    %v139 = vshrl.u32 %v138, 7
    %v140 = vsub.s32 0, %v139
    %v141 = vrot.slane %v136, %v140
    %v159 = vunpack.c.l.b16 %v120
    %v160 = vunpack.c.l.b16 %v121
    %v161 = vunpack.c.l.b16 %v122
    %v162 = vunpack.c.l.b16 %v123
    %v163 = vunpack.c.l.b16 %v124
    %v164 = vunpack.c.l.b16 %v125
    %v165 = vunpack.c.l.b16 %v126
    %v166 = vunpack.c.l.b16 %v127
    %v167 = vunpack.c.l.b16 %v128
    %v168 = vunpack.c.l.b16 %v129
    %v169 = vunpack.c.l.b16 %v130
    %v170 = vunpack.c.l.b16 %v131
    %v171 = vunpack.c.l.b16 %v132
    %v172 = vunpack.c.l.b16 %v133
    %v173 = vunpack.c.l.b16 %v134
    %v174 = vunpack.c.l.b16 %v135
    %v175 = vpack.c.b16 %v160, %v159
    %v176 = vpack.c.b16 %v162, %v161
    %v177 = vpack.c.b16 %v164, %v163
    %v178 = vpack.c.b16 %v166, %v165
    %v179 = vpack.c.b16 %v168, %v167
    %v180 = vpack.c.b16 %v170, %v169
    %v181 = vpack.c.b16 %v172, %v171
    %v182 = vpack.c.b16 %v174, %v173
    %191 = vmatprep.subr.bf16.mxu0 0
    %192 = vmatpush1.bf16.msra.mxu0 %v182
    %193 = vmatprep.subr.bf16.mxu0 0
    %194 = vmatpush1.bf16.msra.mxu0 %v181
    %195 = vmatprep.subr.bf16.mxu0 0
    %196 = vmatpush1.bf16.msra.mxu0 %v180
    %197 = vmatprep.subr.bf16.mxu0 0
    %198 = vmatpush1.bf16.msra.mxu0 %v179
    %199 = vmatprep.subr.bf16.mxu0 0
    %200 = vmatpush1.bf16.msra.mxu0 %v178
    %201 = vmatprep.subr.bf16.mxu0 0
    %202 = vmatpush1.bf16.msra.mxu0 %v177
    %203 = vmatprep.subr.bf16.mxu0 0
    %204 = vmatpush1.bf16.msra.mxu0 %v176
    %205 = vmatprep.subr.bf16.mxu0 0
    %206 = vmatpush1.bf16.msra.mxu0 %v175
    %207 = vmatprep.subr.bf16.mxu0 0
    %208 = vmatpush2.bf16.msra.mxu0 0
    %209 = vmatprep.subr.bf16.mxu0 0
    %210 = vmatpush2.bf16.msra.mxu0 0
    %211 = vmatprep.subr.bf16.mxu0 0
    %212 = vmatpush2.bf16.msra.mxu0 0
    %213 = vmatprep.subr.bf16.mxu0 0
    %214 = vmatpush2.bf16.msra.mxu0 0
    %215 = vmatprep.subr.bf16.mxu0 0
    %216 = vmatpush2.bf16.msra.mxu0 0
    %217 = vmatprep.subr.bf16.mxu0 0
    %218 = vmatpush2.bf16.msra.mxu0 0
    %219 = vmatprep.subr.bf16.mxu0 0
    %220 = vmatpush2.bf16.msra.mxu0 0
    %221 = vmatprep.subr.bf16.mxu0 0
    %222 = vmatpush2.bf16.msra.mxu0 0
    %223 = vmatprep.mubr.bf16.mxu0 0
    %224 = vmatmul.mubr.bf16.gmra.mxu0 %v119
    %v225 = vpop.f32.mrf.mxu0
    %v226 = vadd.f32 %v141, %v225
    %v227 = vpop.f32.mrf.mxu0
    %v228 = vpop.f32.mrf.mxu0
    %v229 = vpop.f32.mrf.mxu0
    %230 = vdwg.mxu0
    %v231 = vmax.f32 %v226, 0.0
    %v232 = vld [vmem:[%s5] sm:$0x1]
    %v234 = vlaneseq
    %v235 = vshrl.u32 %v234, 7
    %v236 = vsub.s32 0, %v235
    %v237 = vrot.slane %v232, %v236
    %v239 = vmul.f32 %v231, %v237
    %vm240 = vcmask 1041408
    %v241 = vsel %vm240, %v239, 0.0
    %242 = vadd.xlane.f32.xlu0 %v241
    %v243 = vpop.xlane.xlu0 %242
    %v244 = vld [vmem:[#allocation2] sm:$0x1]
    %v246 = vlaneseq
    %v247 = vshrl.u32 %v246, 7
    %v248 = vsub.s32 0, %v247
    %v249 = vrot.slane %v244, %v248
    %v251 = vadd.f32 %v243, %v249
    %vm252 = vcmask 1024
    %253 = vst.msk [vmem:[%s7] sm:$0x3] %vm252, %v251
    // Predicated region
    $region38: #{tpu_custom_call.1} parent=1 // pred_check
      _
    $region39: #{tpu_custom_call.1} parent=1 // pred_check_branch
      %255 = sbr.rel (0) target = $region41
    $region40: #{tpu_custom_call.1} parent=1 // pred_region
      _
    $region41: #{tpu_custom_call.1} parent=1 // pred_fallthru
      _
    // Predicated region
    $region42: #{tpu_custom_call.1} parent=1 // pred_check
      _
    $region43: #{tpu_custom_call.1} parent=1 // pred_check_branch
      %257 = sbr.rel (0) target = $region45
    $region44: #{tpu_custom_call.1} parent=1 // pred_region
      _
    $region45: #{tpu_custom_call.1} parent=1 // pred_fallthru
      _
    %258 = vsyncpa [#allocation4], 1
    %259 = vsyncpa [#allocation6], 1

</llo_original>
